<compile_context>
chip_gen: v6e
topology: v6e:2x2x1
jax: 0.10.0
libtpu: 0.0.40
codegen_flags: <defaults>
</compile_context>

<pallas_src>
import functools

import jax
import jax.numpy as jnp
from jax import lax
from jax.experimental import pallas as pl
from jax.experimental.pallas import tpu as pltpu

MARGIN = 0.3
BIG = 1e9  # finite sentinel for masked max/min (avoids inf arithmetic)


def _triplet_kernel(n_valid, n_pad, margin, gram_dtype,
                    x_ref, tcol_ref, trow_ref, loss_ref, correct_ref,
                    gram_acc, sumsq_acc):
    k = pl.program_id(0)

    @pl.when(k == 0)
    def _init():
        gram_acc[...] = jnp.zeros_like(gram_acc)
        sumsq_acc[...] = jnp.zeros_like(sumsq_acc)

    chunk = x_ref[...]                                    # (n_pad, TK) native dtype
    chunk_f32 = chunk.astype(jnp.float32)
    # Row sum-of-squares of the RAW features (for F.normalize), f32 accumulate.
    sumsq_acc[...] += jnp.sum(chunk_f32 * chunk_f32, axis=1, keepdims=True)
    # Raw Gram accumulated on the MXU; contract dim 1 of BOTH operands (A A^T),
    # optional bf16 operands with f32 accumulation.
    lhs = chunk.astype(gram_dtype)
    gram_acc[...] += lax.dot_general(lhs, lhs, (((1,), (1,)), ((), ())),
                                     preferred_element_type=jnp.float32)

    @pl.when(k == pl.num_programs(0) - 1)
    def _finalize():
        # F.normalize(x, dim=1): x * rsqrt(max(||x||^2, 1e-24))  (EUP rsqrt)
        inv = lax.rsqrt(jnp.maximum(sumsq_acc[...], 1e-24))      # (n_pad, 1)
        inv_row = jnp.transpose(inv)                             # (1, n_pad) tiny XLU
        # Rows are unit-norm after normalization -> squared pairwise distance.
        dist2 = 2.0 - 2.0 * ((gram_acc[...] * inv) * inv_row)    # (n_pad, n_pad)

        same = tcol_ref[...] == trow_ref[...]                    # (n_pad, n_pad) VPU
        if n_valid < n_pad:
            col_valid = lax.broadcasted_iota(jnp.int32, (1, n_pad), 1) < n_valid
            pos_mask = jnp.logical_and(same, col_valid)
            neg_mask = jnp.logical_and(jnp.logical_not(same), col_valid)
        else:
            pos_mask = same
            neg_mask = jnp.logical_not(same)

        # Hard positive / hard negative mined on SQUARED distances (sqrt and the
        # 1e-12 clamp are monotone, so argmax/argmin are unchanged).
        ap2 = jnp.max(jnp.where(pos_mask, dist2, -BIG), axis=1, keepdims=True)
        an2 = jnp.min(jnp.where(neg_mask, dist2, BIG), axis=1, keepdims=True)
        dist_ap = jnp.sqrt(jnp.maximum(ap2, 1e-12))              # (n_pad, 1)
        dist_an = jnp.sqrt(jnp.maximum(an2, 1e-12))

        # MarginRankingLoss(margin)(dist_an, dist_ap, y=1), reduction='mean'
        hinge = jnp.maximum(dist_ap - dist_an + margin, 0.0)
        hits = dist_an >= dist_ap
        if n_valid < n_pad:
            row_valid = lax.broadcasted_iota(jnp.int32, (n_pad, 1), 0) < n_valid
            hinge = jnp.where(row_valid, hinge, 0.0)
            hits = jnp.logical_and(hits, row_valid)

        loss_ref[0, 0] = jnp.sum(hinge) * (1.0 / n_valid)
        correct_ref[0, 0] = jnp.sum(hits.astype(jnp.int32))


def ori_triplet_loss(inputs, targets, margin=MARGIN):
    """inputs: (n, d) float, targets: (n,) int -> (loss f32 scalar, correct i32 scalar)."""
    n, d = inputs.shape
    d_pad = ((d + 127) // 128) * 128
    n_pad = ((n + 7) // 8) * 8

    x = inputs                          # keep native dtype: halves HBM->VMEM for bf16
    t = targets.astype(jnp.int32)
    if d_pad != d or n_pad != n:
        # Single zero-pad; padded rows/columns are masked out in-kernel.
        x = jnp.pad(x, ((0, n_pad - n), (0, d_pad - d)))
        t = jnp.pad(t, (0, n_pad - n))
    t_col = t.reshape(n_pad, 1)
    t_row = t.reshape(1, n_pad)

    # bf16 Gram operands whenever the MXU matters (128 rows already fill a v5e
    # MXU tile; v5e f32 matmul is slow multi-pass emulation) or input is bf16.
    use_bf16 = (x.dtype == jnp.bfloat16) or (n >= 128)
    gram_dtype = jnp.bfloat16 if use_bf16 else jnp.float32

    # Feature-chunk size: a multiple of 128 that divides d_pad, at most 512.
    tk = d_pad
    if d_pad > 512:
        for cand in (512, 384, 256, 128):
            if d_pad % cand == 0:
                tk = cand
                break
    kt = d_pad // tk

    kernel = functools.partial(_triplet_kernel, n, n_pad, float(margin), gram_dtype)

    # Explicit scoped-VMEM budget: double-buffered x chunks + Gram scratch +
    # mining temporaries (v5e's default scoped limit is only 16 MiB).
    vmem_est = (2 * n_pad * tk * x.dtype.itemsize
                + 6 * n_pad * n_pad * 4
                + 64 * 1024)
    vmem_limit = int(min(64 * 1024 * 1024, max(32 * 1024 * 1024, vmem_est)))

    smem_spec = pl.BlockSpec(memory_space=pltpu.MemorySpace.SMEM)
    loss, correct = pl.pallas_call(
        kernel,
        out_shape=(
            jax.ShapeDtypeStruct((1, 1), jnp.float32),
            jax.ShapeDtypeStruct((1, 1), jnp.int32),
        ),
        grid_spec=pltpu.PrefetchScalarGridSpec(
            num_scalar_prefetch=0,
            grid=(kt,),
            in_specs=[
                pl.BlockSpec((n_pad, tk), lambda k: (0, k)),   # feature chunks
                pl.BlockSpec((n_pad, 1), lambda k: (0, 0)),    # labels as column
                pl.BlockSpec((1, n_pad), lambda k: (0, 0)),    # labels as row
            ],
            out_specs=(smem_spec, smem_spec),
            scratch_shapes=[
                pltpu.VMEM((n_pad, n_pad), jnp.float32),       # raw Gram accumulator
                pltpu.VMEM((n_pad, 1), jnp.float32),           # row sum-of-squares
            ],
        ),
        compiler_params=pltpu.CompilerParams(
            dimension_semantics=("arbitrary",),
            vmem_limit_bytes=vmem_limit,
        ),
    )(x, t_col, t_row)
    return loss[0, 0], correct[0, 0]


if __name__ == "__main__":
    key = jax.random.PRNGKey(0)
    n, d = 8, 32  # small batch, small feature dim
    x = jax.random.normal(key, (n, d), dtype=jnp.float32)
    # 4 identities, 2 samples each (typical PK-sampled triplet batch)
    targets = jnp.array([0, 0, 1, 1, 2, 2, 3, 3], dtype=jnp.int32)

    loss, correct = ori_triplet_loss(x, targets)
    jax.block_until_ready((loss, correct))
    print("KERNEL_OK")
</pallas_src>

<mosaic_0001>
module attributes {stable_mosaic.version = 11 : i64} {
  func.func @_triplet_kernel(%arg0: i32, %arg1: memref<8x128xf32, #tpu.memory_space<vmem>>, %arg2: memref<8x1xi32, #tpu.memory_space<vmem>>, %arg3: memref<1x8xi32, #tpu.memory_space<vmem>>, %arg4: memref<1x1xf32, #tpu.memory_space<smem>>, %arg5: memref<1x1xi32, #tpu.memory_space<smem>>, %arg6: memref<8x8xf32, #tpu.memory_space<vmem>>, %arg7: memref<8x1xf32, #tpu.memory_space<vmem>>) attributes {dimension_semantics = [#tpu.dimension_semantics<arbitrary>], iteration_bounds = array<i64: 1>, scalar_prefetch = 0 : i64, scratch_operands = 2 : i64, tpu.core_type = #tpu.core_type<tc>, window_params = [{transform_indices = @transform_0, window_bounds = array<i64: 8, 128>}, {pipeline_mode = #tpu.pipeline_mode<synchronous>, transform_indices = @transform_1, window_bounds = array<i64: 8, 1>}, {pipeline_mode = #tpu.pipeline_mode<synchronous>, transform_indices = @transform_2, window_bounds = array<i64: 1, 8>}, {transform_indices = @transform_3, window_bounds = array<i64: 1, 1>}, {transform_indices = @transform_4, window_bounds = array<i64: 1, 1>}]} {
    %c0_i32 = arith.constant 0 : i32
    %0 = arith.cmpi eq, %arg0, %c0_i32 : i32
    %1 = arith.extui %0 : i1 to i32
    %c0_i32_0 = arith.constant 0 : i32
    %2 = arith.cmpi ne, %1, %c0_i32_0 : i32
    scf.if %2 {
      %cst_13 = arith.constant 0.000000e+00 : f32
      %17 = vector.broadcast %cst_13 : f32 to vector<8x8xf32>
      %c0_14 = arith.constant 0 : index
      %c0_15 = arith.constant 0 : index
      %18 = vector.load %arg6[%c0_14, %c0_15] : memref<8x8xf32, #tpu.memory_space<vmem>>, vector<8x8xf32>
      tpu.vector_store %arg6[%c0_14, %c0_15], %17 {strides = array<i32>} : memref<8x8xf32, #tpu.memory_space<vmem>>, vector<8x8xf32>,
      %cst_16 = arith.constant 0.000000e+00 : f32
      %19 = vector.broadcast %cst_16 : f32 to vector<8x1xf32>
      %c0_17 = arith.constant 0 : index
      %c0_18 = arith.constant 0 : index
      %20 = vector.load %arg7[%c0_17, %c0_18] : memref<8x1xf32, #tpu.memory_space<vmem>>, vector<8x1xf32>
      tpu.vector_store %arg7[%c0_17, %c0_18], %19 {strides = array<i32>} : memref<8x1xf32, #tpu.memory_space<vmem>>, vector<8x1xf32>,
    } else {
    }
    %c0 = arith.constant 0 : index
    %c0_1 = arith.constant 0 : index
    %3 = vector.load %arg1[%c0, %c0_1] : memref<8x128xf32, #tpu.memory_space<vmem>>, vector<8x128xf32>
    %c0_2 = arith.constant 0 : index
    %c0_3 = arith.constant 0 : index
    %4 = vector.load %arg7[%c0_2, %c0_3] : memref<8x1xf32, #tpu.memory_space<vmem>>, vector<8x1xf32>
    %5 = arith.mulf %3, %3 : vector<8x128xf32>
    %cst = arith.constant dense<0.000000e+00> : vector<8xf32>
    %6 = vector.multi_reduction <add>, %5, %cst [1] : vector<8x128xf32> to vector<8xf32>
    %7 = vector.shape_cast %6 : vector<8xf32> to vector<8x1xf32>
    %8 = arith.addf %4, %7 : vector<8x1xf32>
    %c0_4 = arith.constant 0 : index
    %c0_5 = arith.constant 0 : index
    %9 = vector.load %arg7[%c0_4, %c0_5] : memref<8x1xf32, #tpu.memory_space<vmem>>, vector<8x1xf32>
    tpu.vector_store %arg7[%c0_4, %c0_5], %8 {strides = array<i32>} : memref<8x1xf32, #tpu.memory_space<vmem>>, vector<8x1xf32>,
    %c0_6 = arith.constant 0 : index
    %c0_7 = arith.constant 0 : index
    %10 = vector.load %arg6[%c0_6, %c0_7] : memref<8x8xf32, #tpu.memory_space<vmem>>, vector<8x8xf32>
    %cst_8 = arith.constant dense<0.000000e+00> : vector<8x8xf32>
    %11 = tpu.matmul %3, %3, %cst_8 {dimension_numbers = #tpu.dot_dimension_numbers<[1], [1], [0], [0], [0, 0, 1, 0], [], []>} : vector<8x128xf32>, vector<8x128xf32>, vector<8x8xf32> -> vector<8x8xf32>
    %12 = arith.addf %10, %11 : vector<8x8xf32>
    %c0_9 = arith.constant 0 : index
    %c0_10 = arith.constant 0 : index
    %13 = vector.load %arg6[%c0_9, %c0_10] : memref<8x8xf32, #tpu.memory_space<vmem>>, vector<8x8xf32>
    tpu.vector_store %arg6[%c0_9, %c0_10], %12 {strides = array<i32>} : memref<8x8xf32, #tpu.memory_space<vmem>>, vector<8x8xf32>,
    %c0_i32_11 = arith.constant 0 : i32
    %14 = arith.cmpi eq, %arg0, %c0_i32_11 : i32
    %15 = arith.extui %14 : i1 to i32
    %c0_i32_12 = arith.constant 0 : i32
    %16 = arith.cmpi ne, %15, %c0_i32_12 : i32
    scf.if %16 {
      %c0_13 = arith.constant 0 : index
      %c0_14 = arith.constant 0 : index
      %17 = vector.load %arg7[%c0_13, %c0_14] : memref<8x1xf32, #tpu.memory_space<vmem>>, vector<8x1xf32>
      %cst_15 = arith.constant 1.000000e-24 : f32
      %18 = vector.broadcast %cst_15 : f32 to vector<8x1xf32>
      %19 = arith.maximumf %17, %18 : vector<8x1xf32>
      %20 = math.rsqrt %19 : vector<8x1xf32>
      %21 = tpu.transpose %20, [1, 0] : vector<8x1xf32> -> vector<1x8xf32>
      %c0_16 = arith.constant 0 : index
      %c0_17 = arith.constant 0 : index
      %22 = vector.load %arg6[%c0_16, %c0_17] : memref<8x8xf32, #tpu.memory_space<vmem>>, vector<8x8xf32>
      %23 = vector.broadcast %20 : vector<8x1xf32> to vector<8x8xf32>
      %24 = arith.mulf %22, %23 : vector<8x8xf32>
      %25 = vector.broadcast %21 : vector<1x8xf32> to vector<8x8xf32>
      %26 = arith.mulf %24, %25 : vector<8x8xf32>
      %cst_18 = arith.constant 2.000000e+00 : f32
      %27 = vector.broadcast %cst_18 : f32 to vector<8x8xf32>
      %28 = arith.mulf %27, %26 : vector<8x8xf32>
      %cst_19 = arith.constant 2.000000e+00 : f32
      %29 = vector.broadcast %cst_19 : f32 to vector<8x8xf32>
      %30 = arith.subf %29, %28 : vector<8x8xf32>
      %c0_20 = arith.constant 0 : index
      %c0_21 = arith.constant 0 : index
      %31 = vector.load %arg2[%c0_20, %c0_21] : memref<8x1xi32, #tpu.memory_space<vmem>>, vector<8x1xi32>
      %c0_22 = arith.constant 0 : index
      %c0_23 = arith.constant 0 : index
      %32 = vector.load %arg3[%c0_22, %c0_23] : memref<1x8xi32, #tpu.memory_space<vmem>>, vector<1x8xi32>
      %33 = vector.broadcast %31 : vector<8x1xi32> to vector<8x8xi32>
      %34 = vector.broadcast %32 : vector<1x8xi32> to vector<8x8xi32>
      %35 = arith.cmpi eq, %33, %34 : vector<8x8xi32>
      %cst_24 = arith.constant dense<true> : vector<8x8xi1>
      %36 = arith.xori %35, %cst_24 : vector<8x8xi1>
      %cst_25 = arith.constant -1.000000e+09 : f32
      %37 = vector.broadcast %cst_25 : f32 to vector<8x8xf32>
      %38 = arith.select %35, %30, %37 : vector<8x8xi1>, vector<8x8xf32>
      %cst_26 = arith.constant dense<0xFF800000> : vector<8xf32>
      %39 = vector.multi_reduction <maximumf>, %38, %cst_26 [1] : vector<8x8xf32> to vector<8xf32>
      %40 = vector.shape_cast %39 : vector<8xf32> to vector<8x1xf32>
      %cst_27 = arith.constant 1.000000e+09 : f32
      %41 = vector.broadcast %cst_27 : f32 to vector<8x8xf32>
      %42 = arith.select %36, %30, %41 : vector<8x8xi1>, vector<8x8xf32>
      %cst_28 = arith.constant dense<0x7F800000> : vector<8xf32>
      %43 = vector.multi_reduction <minimumf>, %42, %cst_28 [1] : vector<8x8xf32> to vector<8xf32>
      %44 = vector.shape_cast %43 : vector<8xf32> to vector<8x1xf32>
      %cst_29 = arith.constant 9.99999996E-13 : f32
      %45 = vector.broadcast %cst_29 : f32 to vector<8x1xf32>
      %46 = arith.maximumf %40, %45 : vector<8x1xf32>
      %47 = math.sqrt %46 : vector<8x1xf32>
      %cst_30 = arith.constant 9.99999996E-13 : f32
      %48 = vector.broadcast %cst_30 : f32 to vector<8x1xf32>
      %49 = arith.maximumf %44, %48 : vector<8x1xf32>
      %50 = math.sqrt %49 : vector<8x1xf32>
      %51 = arith.subf %47, %50 : vector<8x1xf32>
      %cst_31 = arith.constant 3.000000e-01 : f32
      %52 = vector.broadcast %cst_31 : f32 to vector<8x1xf32>
      %53 = arith.addf %51, %52 : vector<8x1xf32>
      %cst_32 = arith.constant 0.000000e+00 : f32
      %54 = vector.broadcast %cst_32 : f32 to vector<8x1xf32>
      %55 = arith.maximumf %53, %54 : vector<8x1xf32>
      %56 = arith.cmpf oge, %50, %47 : vector<8x1xf32>
      %57 = vector.shape_cast %55 : vector<8x1xf32> to vector<1x8x1xf32>
      %cst_33 = arith.constant dense<0.000000e+00> : vector<1xf32>
      %58 = vector.multi_reduction <add>, %57, %cst_33 [1, 2] : vector<1x8x1xf32> to vector<1xf32>
      %59 = vector.shape_cast %58 : vector<1xf32> to vector<1x1x1xf32>
      %60 = vector.extract %59[0, 0, 0] : f32 from vector<1x1x1xf32>
      %cst_34 = arith.constant 1.250000e-01 : f32
      %61 = arith.mulf %60, %cst_34 : f32
      %c0_35 = arith.constant 0 : index
      %c0_36 = arith.constant 0 : index
      %62 = memref.load %arg4[%c0_35, %c0_36] : memref<1x1xf32, #tpu.memory_space<smem>>
      memref.store %61, %arg4[%c0_35, %c0_36] : memref<1x1xf32, #tpu.memory_space<smem>>
      %63 = arith.extui %56 : vector<8x1xi1> to vector<8x1xi32>
      %64 = vector.shape_cast %63 : vector<8x1xi32> to vector<1x8x1xi32>
      %cst_37 = arith.constant dense<0> : vector<1xi32>
      %65 = vector.multi_reduction <add>, %64, %cst_37 [1, 2] : vector<1x8x1xi32> to vector<1xi32>
      %66 = vector.shape_cast %65 : vector<1xi32> to vector<1x1x1xi32>
      %67 = vector.extract %66[0, 0, 0] : i32 from vector<1x1x1xi32>
      %c0_38 = arith.constant 0 : index
      %c0_39 = arith.constant 0 : index
      %68 = memref.load %arg5[%c0_38, %c0_39] : memref<1x1xi32, #tpu.memory_space<smem>>
      memref.store %67, %arg5[%c0_38, %c0_39] : memref<1x1xi32, #tpu.memory_space<smem>>
    } else {
    }
    return
  }
  func.func @transform_0(%arg0: i32) -> (i32, i32) {
    %c0_i32 = arith.constant 0 : i32
    %c0_i32_0 = arith.constant 0 : i32
    return %c0_i32, %arg0 : i32, i32
  }
  func.func @transform_1(%arg0: i32) -> (i32, i32) {
    %c0_i32 = arith.constant 0 : i32
    %c0_i32_0 = arith.constant 0 : i32
    %c0_i32_1 = arith.constant 0 : i32
    return %c0_i32, %c0_i32_0 : i32, i32
  }
  func.func @transform_2(%arg0: i32) -> (i32, i32) {
    %c0_i32 = arith.constant 0 : i32
    %c0_i32_0 = arith.constant 0 : i32
    %c0_i32_1 = arith.constant 0 : i32
    return %c0_i32, %c0_i32_0 : i32, i32
  }
  func.func @transform_3(%arg0: i32) -> (i32, i32) {
    %c0_i32 = arith.constant 0 : i32
    %c0_i32_0 = arith.constant 0 : i32
    %c0_i32_1 = arith.constant 0 : i32
    return %c0_i32, %c0_i32_0 : i32, i32
  }
  func.func @transform_4(%arg0: i32) -> (i32, i32) {
    %c0_i32 = arith.constant 0 : i32
    %c0_i32_0 = arith.constant 0 : i32
    %c0_i32_1 = arith.constant 0 : i32
    return %c0_i32, %c0_i32_0 : i32, i32
  }
}

</mosaic_0001>

<llo_original>
// kernel: tpu_custom_call.1
$region0: #{tpu_custom_call.1}
  #allocation0 [shape = 'u32[]', space=smem, size = 0x4, offset = 0x4, fixed_abs, tag = 'smem constant byte address 0x4 - core index']
  #allocation1 [shape = 'u32[144,128]{1,0:T(1,128)}', space=vmem, size = 0x12000, scoped, tag = 'internal scratch']
  #allocation2 [shape = 'f32[8,8]{1,0:T(8,128)}', space=vmem, size = 0x1000, scoped, tag = 'scratch operand']
  #allocation3 [shape = 'f32[8,1]{1,0:T(8,128)}', space=vmem, size = 0x1000, scoped, tag = 'scratch operand']
  %s0 = inlined_call_operand.vmem [shape: f32[8,128], index: 0, kind: input, shape index: {}]
  %s1 = inlined_call_operand.vmem [shape: s32[8,1], index: 1, kind: input, shape index: {}]
  %s2 = inlined_call_operand.vmem [shape: s32[1,8], index: 2, kind: input, shape index: {}]
  %s3 = inlined_call_operand.hbm [shape: f32[1,1], index: 3, kind: output, shape index: {0}]
  %s4 = inlined_call_operand.hbm [shape: s32[1,1], index: 4, kind: output, shape index: {1}]
  %5 = xla_tuple %s3, %s4
  %s6 = sld [smem:[#allocation0]]
  $region38: #{tpu_custom_call.1} parent=0
    _
  %s8 = ssub.s32 1, %s6
  %s9 = scalar_select 0, %s8, %s6
  $region1: #{tpu_custom_call.1} parent=0
    #allocation4 [shape = 'u8[512]{0}', space=smem, size = 0x200, scoped, tag = 'output window, operand 0, single buffered']
    #allocation5 [shape = 's32[1]{0}', space=sflag, size = 0x4, scoped, tag = 'scoped memory for tpu_custom_call.1']
    #allocation6 [shape = 'u8[512]{0}', space=smem, size = 0x200, scoped, tag = 'output window, operand 1, single buffered']
    #allocation7 [shape = 's32[1]{0}', space=sflag, size = 0x4, scoped, tag = 'scoped memory for tpu_custom_call.1']
    %10 = vsyncpa [#allocation5], 0
    %11 = vsyncpa [#allocation7], 0
    // Predicated region
    $region2: #{tpu_custom_call.1} parent=1 // pred_check
      _
    $region3: #{tpu_custom_call.1} parent=1 // pred_check_branch
      %13 = sbr.rel (0) target = $region5
    $region4: #{tpu_custom_call.1} parent=1 // pred_region
      _
    $region5: #{tpu_custom_call.1} parent=1 // pred_fallthru
      _
    // Predicated region
    $region6: #{tpu_custom_call.1} parent=1 // pred_check
      _
    $region7: #{tpu_custom_call.1} parent=1 // pred_check_branch
      %15 = sbr.rel (0) target = $region9
    $region8: #{tpu_custom_call.1} parent=1 // pred_region
      _
    $region9: #{tpu_custom_call.1} parent=1 // pred_fallthru
      _
    // Predicated region
    $region10: #{tpu_custom_call.1} parent=1 // pred_check
      _
    $region11: #{tpu_custom_call.1} parent=1 // pred_check_branch
      %17 = sbr.rel (0) target = $region13
    $region12: #{tpu_custom_call.1} parent=1 // pred_region
      _
    $region13: #{tpu_custom_call.1} parent=1 // pred_fallthru
      _
    %p18 = scmp.eq.s32.totalorder 0, 0
    // Predicated region
    $region14: #{tpu_custom_call.1} parent=1 // pred_check
      %p19 = pneg %p18
    $region15: #{tpu_custom_call.1} parent=1 // pred_check_branch
      %21 = sbr.rel (%p19) target = $region17
    $region16: #{tpu_custom_call.1} parent=1 // pred_region
      %vm22 = vcmask 64512
      %23 = vst.msk [vmem:[#allocation2] sm:$0xff] %vm22, 0.0
      %vm24 = vcmask 7168
      %25 = vst.msk [vmem:[#allocation3] sm:$0xff] %vm24, 0.0
    $region17: #{tpu_custom_call.1} parent=1 // pred_fallthru
      _
    %v26 = vld [vmem:[%s0] sm:$0xff]
    %v27 = vld [vmem:[#allocation3] sm:$0xff]
    %v28 = vmul.f32 %v26, %v26
    %29 = vadd.xlane.f32.xlu0 %v28
    %v30 = vpop.xlane.xlu0 %29
    %v31 = vadd.f32 %v27, %v30
    %vm32 = vcmask 7168
    %33 = vst.msk [vmem:[#allocation3] sm:$0xff] %vm32, %v31
    %v34 = vld [vmem:[#allocation2] sm:$0xff]
    %35 = vmatprep.subr.mxu0 0.0
    %36 = vmatpush1.xpose.msra.mxu0 0.0
    %37 = vmatprep.subr.mxu0 0.0
    %38 = vmatpush1.xpose.msra.mxu0 0.0
    %39 = vmatprep.subr.mxu0 0.0
    %40 = vmatpush1.xpose.msra.mxu0 0.0
    %41 = vmatprep.subr.mxu0 0.0
    %42 = vmatpush1.xpose.msra.mxu0 0.0
    %43 = vmatprep.subr.mxu0 0.0
    %44 = vmatpush1.xpose.msra.mxu0 0.0
    %45 = vmatprep.subr.mxu0 0.0
    %46 = vmatpush1.xpose.msra.mxu0 0.0
    %47 = vmatprep.subr.mxu0 0.0
    %48 = vmatpush1.xpose.msra.mxu0 0.0
    %49 = vmatprep.subr.mxu0 0.0
    %50 = vmatpush1.xpose.msra.mxu0 0.0
    %51 = vmatprep.subr.mxu0 0.0
    %52 = vmatpush1.xpose.msra.mxu0 0.0
    %53 = vmatprep.subr.mxu0 0.0
    %54 = vmatpush1.xpose.msra.mxu0 0.0
    %55 = vmatprep.subr.mxu0 0.0
    %56 = vmatpush1.xpose.msra.mxu0 0.0
    %57 = vmatprep.subr.mxu0 0.0
    %58 = vmatpush1.xpose.msra.mxu0 0.0
    %59 = vmatprep.subr.mxu0 0.0
    %60 = vmatpush1.xpose.msra.mxu0 0.0
    %61 = vmatprep.subr.mxu0 0.0
    %62 = vmatpush1.xpose.msra.mxu0 0.0
    %63 = vmatprep.subr.mxu0 0.0
    %64 = vmatpush1.xpose.msra.mxu0 0.0
    %65 = vmatprep.subr.mxu0 0.0
    %66 = vmatpush1.xpose.msra.mxu0 %v26
    %67 = vmatprep.subr.mxu0 0.0
    %68 = vmatpush2.xpose.msra.mxu0 0.0
    %69 = vmatprep.subr.mxu0 0.0
    %70 = vmatpush2.xpose.msra.mxu0 0.0
    %71 = vmatprep.subr.mxu0 0.0
    %72 = vmatpush2.xpose.msra.mxu0 0.0
    %73 = vmatprep.subr.mxu0 0.0
    %74 = vmatpush2.xpose.msra.mxu0 0.0
    %75 = vmatprep.subr.mxu0 0.0
    %76 = vmatpush2.xpose.msra.mxu0 0.0
    %77 = vmatprep.subr.mxu0 0.0
    %78 = vmatpush2.xpose.msra.mxu0 0.0
    %79 = vmatprep.subr.mxu0 0.0
    %80 = vmatpush2.xpose.msra.mxu0 0.0
    %81 = vmatprep.subr.mxu0 0.0
    %82 = vmatpush2.xpose.msra.mxu0 0.0
    %83 = vmatprep.subr.mxu0 0.0
    %84 = vmatpush2.xpose.msra.mxu0 0.0
    %85 = vmatprep.subr.mxu0 0.0
    %86 = vmatpush2.xpose.msra.mxu0 0.0
    %87 = vmatprep.subr.mxu0 0.0
    %88 = vmatpush2.xpose.msra.mxu0 0.0
    %89 = vmatprep.subr.mxu0 0.0
    %90 = vmatpush2.xpose.msra.mxu0 0.0
    %91 = vmatprep.subr.mxu0 0.0
    %92 = vmatpush2.xpose.msra.mxu0 0.0
    %93 = vmatprep.subr.mxu0 0.0
    %94 = vmatpush2.xpose.msra.mxu0 0.0
    %95 = vmatprep.subr.mxu0 0.0
    %96 = vmatpush2.xpose.msra.mxu0 0.0
    %97 = vmatprep.subr.mxu0 0.0
    %98 = vmatpush2.xpose.msra.mxu0 0.0
    %99 = vmatprep.mubr.f32.mxu0 0.0
    %100 = vmatmul.mubr.f32.gmra.mxu0 %v26
    %v101 = vpop.f32.mrf.mxu0
    %v102 = vadd.f32 0.0, %v101
    %v103 = vpop.f32.mrf.mxu0
    %104 = vdwg.mxu0
    %v105 = vadd.f32 %v34, %v102
    %vm106 = vcmask 64512
    %107 = vst.msk [vmem:[#allocation2] sm:$0xff] %vm106, %v105
    // Predicated region
    $region18: #{tpu_custom_call.1} parent=1 // pred_check
      %p108 = pneg %p18
    $region19: #{tpu_custom_call.1} parent=1 // pred_check_branch
      %110 = sbr.rel (%p108) target = $region21
    $region20: #{tpu_custom_call.1} parent=1 // pred_region
      %v111 = vld [vmem:[#allocation3] sm:$0xff]
      %v112 = vmax.f32 %v111, 1e-24
      %v113 = vrsqrt.pop %v112
      %114 = vxpose.xlu0.b32.start [1/16] %v113, 128
      %115 = vxpose.xlu0.b32.cont [2/16] 0.0, 128
      %116 = vxpose.xlu0.b32.cont [3/16] 0.0, 128
      %117 = vxpose.xlu0.b32.cont [4/16] 0.0, 128
      %118 = vxpose.xlu0.b32.cont [5/16] 0.0, 128
      %119 = vxpose.xlu0.b32.cont [6/16] 0.0, 128
      %120 = vxpose.xlu0.b32.cont [7/16] 0.0, 128
      %121 = vxpose.xlu0.b32.cont [8/16] 0.0, 128
      %122 = vxpose.xlu0.b32.cont [9/16] 0.0, 128
      %123 = vxpose.xlu0.b32.cont [10/16] 0.0, 128
      %124 = vxpose.xlu0.b32.cont [11/16] 0.0, 128
      %125 = vxpose.xlu0.b32.cont [12/16] 0.0, 128
      %126 = vxpose.xlu0.b32.cont [13/16] 0.0, 128
      %127 = vxpose.xlu0.b32.cont [14/16] 0.0, 128
      %128 = vxpose.xlu0.b32.cont [15/16] 0.0, 128
      %129 = vxpose.xlu0.b32.end [16/16] 0.0, 128
      %v130 = vpop.trf.xlu0
      %v131 = vpop.trf.xlu0
      %v132 = vpop.trf.xlu0
      %v133 = vpop.trf.xlu0
      %v134 = vpop.trf.xlu0
      %v135 = vpop.trf.xlu0
      %v136 = vpop.trf.xlu0
      %v137 = vpop.trf.xlu0
      %v138 = vpop.trf.xlu0
      %v139 = vpop.trf.xlu0
      %v140 = vpop.trf.xlu0
      %v141 = vpop.trf.xlu0
      %v142 = vpop.trf.xlu0
      %v143 = vpop.trf.xlu0
      %v144 = vpop.trf.xlu0
      %v145 = vpop.trf.xlu0
      %v146 = vld [vmem:[#allocation2] sm:$0xff]
      %148 = vset.pattern.permute.xlu0 0
      %149 = vperm.xlu0 %148, %v113
      %v150 = vpop.permute.xlu0 %149
      %v152 = vmul.f32 %v146, %v150
      %v153 = vlaneseq
      %v154 = vshrl.u32 %v153, 7
      %v155 = vsub.s32 0, %v154
      %v156 = vrot.slane %v130, %v155
      %v157 = vmul.f32 %v152, %v156
      %v158 = vmul.f32 %v157, 2.0
      %v159 = vsub.f32 2.0, %v158
      %v160 = vld [vmem:[%s1] sm:$0xff]
      %v161 = vld [vmem:[%s2] sm:$0x1]
      %162 = vset.pattern.permute.xlu0 0
      %163 = vperm.xlu0 %162, %v160
      %v164 = vpop.permute.xlu0 %163
      %v165 = vlaneseq
      %v166 = vshrl.u32 %v165, 7
      %v167 = vsub.s32 0, %v166
      %v168 = vrot.slane %v161, %v167
      %vm169 = vcmp.eq.s32.totalorder %v164, %v168
      %vm170 = vmxor %vm169, 1
      %v171 = vsel %vm169, %v159, -1e+09
      %v172 = vsel %vm106, %v171, -inf
      %173 = vmax.xlane.f32.xlu0 %v172
      %v174 = vpop.xlane.xlu0 %173
      %v175 = vsel %vm170, %v159, 1e+09
      %v176 = vsel %vm106, %v175, inf
      %177 = vmin.xlane.f32.xlu0 %v176
      %v178 = vpop.xlane.xlu0 %177
      %v179 = vmax.f32 %v174, 1e-12
      %v180 = vrsqrt.pop %v179
      %v181 = vmul.f32 %v179, %v180
      %vm182 = vcmp.eq.f32.partialorder %v179, inf
      %v183 = vsel %vm182, %v179, %v181
      %vm184 = vcmp.eq.f32.partialorder %v179, 0.0
      %v185 = vand.u32 %v179, 2147483648
      %v186 = vsel %vm184, %v185, %v183
      %v187 = vmax.f32 %v178, 1e-12
      %v188 = vrsqrt.pop %v187
      %v189 = vmul.f32 %v187, %v188
      %vm190 = vcmp.eq.f32.partialorder %v187, inf
      %v191 = vsel %vm190, %v187, %v189
      %vm192 = vcmp.eq.f32.partialorder %v187, 0.0
      %v193 = vand.u32 %v187, 2147483648
      %v194 = vsel %vm192, %v193, %v191
      %v195 = vsub.f32 %v186, %v194
      %v196 = vadd.f32 %v195, 0.3
      %v197 = vmax.f32 %v196, 0.0
      %vm198 = vcmp.ge.f32.partialorder %v194, %v186
      %v199 = vsel %vm32, %v197, 0.0
      %200 = vadd.xlane.f32.xlu0 %v199
      %v201 = vpop.xlane.xlu0 %200
      %v202 = vrot.slane %v201, 4
      %v203 = vadd.f32 %v201, %v202
      %v204 = vrot.slane %v203, 2
      %v205 = vadd.f32 %v203, %v204
      %v206 = vrot.slane %v205, 1
      %v207 = vadd.f32 %v205, %v206
      %s208 = vtos %v207
      %s209 = smul.f32 %s208, 0.125
      %s210 = scalar_lea.smem [#allocation4], 0
      %211 = sst [smem:[%s210]] %s209
      %v212 = vsel %vm198, 1, 0
      %v213 = vrot.slane %v212, 4
      %v214 = vadd.s32 %v212, %v213
      %v215 = vrot.slane %v214, 2
      %v216 = vadd.s32 %v214, %v215
      %v217 = vrot.slane %v216, 1
      %v218 = vadd.s32 %v216, %v217
      %s219 = vtos %v218
      %s220 = scalar_lea.smem [#allocation6], 0
      %221 = sst [smem:[%s220]] %s219
    $region21: #{tpu_custom_call.1} parent=1 // pred_fallthru
      _
    // Predicated region
    $region22: #{tpu_custom_call.1} parent=1 // pred_check
      _
    $region23: #{tpu_custom_call.1} parent=1 // pred_check_branch
      %223 = sbr.rel (0) target = $region25
    $region24: #{tpu_custom_call.1} parent=1 // pred_region
      %s225 = ssub.s32 16, 16
      %226 = vsyncadd [#allocation5], %s225
      %229 = dma.smem_to_hbm [#allocation4], 16, %s3, [#allocation5]
    $region25: #{tpu_custom_call.1} parent=1 // pred_fallthru
      _
    // Predicated region
    $region26: #{tpu_custom_call.1} parent=1 // pred_check
      _
    $region27: #{tpu_custom_call.1} parent=1 // pred_check_branch
      %231 = sbr.rel (0) target = $region29
    $region28: #{tpu_custom_call.1} parent=1 // pred_region
      %s233 = ssub.s32 16, 16
      %234 = vsyncadd [#allocation7], %s233
      %237 = dma.smem_to_hbm [#allocation6], 16, %s4, [#allocation7]
    $region29: #{tpu_custom_call.1} parent=1 // pred_fallthru
      _
    // Predicated region
    $region30: #{tpu_custom_call.1} parent=1 // pred_check
      _
    $region31: #{tpu_custom_call.1} parent=1 // pred_check_branch
      %239 = sbr.rel (0) target = $region33
    $region32: #{tpu_custom_call.1} parent=1 // pred_region
      %240 = dma.done [#allocation5], 16
    $region33: #{tpu_custom_call.1} parent=1 // pred_fallthru
      _
    // Predicated region
    $region34: #{tpu_custom_call.1} parent=1 // pred_check
      _
    $region35: #{tpu_custom_call.1} parent=1 // pred_check_branch
      %242 = sbr.rel (0) target = $region37
    $region36: #{tpu_custom_call.1} parent=1 // pred_region
      %243 = dma.done [#allocation7], 16
    $region37: #{tpu_custom_call.1} parent=1 // pred_fallthru
      _
    %244 = sfence
    %245 = vsyncpa [#allocation5], 1
    %246 = vsyncpa [#allocation7], 1

</llo_original>
